<compile_context>
chip_gen: v7x
topology: tpu7x:2x2x1
jax: 0.10.0
libtpu: 0.0.40
codegen_flags: <defaults>
</compile_context>

<pallas_src>
import math
from functools import partial

import jax
import jax.numpy as jnp
from jax.experimental import pallas as pl
from jax.experimental.pallas import tpu as pltpu

MAX_TILE = 32768  # lane-tile cap for the full point-cloud path (~25 MiB dbl-buffered)


def _round_up(x, m):
    return ((x + m - 1) // m) * m


def _plan_tiles(n_points, cap=MAX_TILE):
    """Lane tile / padded width / grid for the full point-cloud path."""
    n128 = _round_up(max(n_points, 1), 128)
    grid = max(1, -(-n128 // cap))
    if n128 > 128:
        grid = max(grid, 2)          # v7x megacore: >=2 steps when there's work
    tile = _round_up(-(-n128 // grid), 128)
    grid = -(-n128 // tile)
    n_pad = grid * tile
    return tile, n_pad, grid


# ----------------------------- Pallas kernels -------------------------------

def landmark_kernel(coef_ref, basis_ref, mean_ref, out_ref):
    """only_lm=True: single shot, everything VMEM resident, M pre-folded.

    coef_ref : (1, Kpad)       f32  concat([alpha, delta]) zero-padded
    basis_ref: (Kpad, 3*Lpad)  bf16 projected landmark basis, [x_n | y_n | w] lanes
    mean_ref : (1, 3*Lpad)     f32  projected landmark mean, same layout
    out_ref  : (2, Lpad)       f32  row 0 = screen-x, row 1 = screen-y
    """
    lpad = out_ref.shape[-1]
    g = mean_ref[...] + jnp.dot(coef_ref[...].astype(jnp.bfloat16), basis_ref[...],
                                preferred_element_type=jnp.float32)   # (1, 3*Lpad)
    x_n = g[:, 0:lpad]
    y_n = g[:, lpad:2 * lpad]
    w = g[:, 2 * lpad:3 * lpad]
    inv_w = 1.0 / w
    # single combined store (one unmasked vst path instead of two 1-sublane stores)
    out_ref[...] = jnp.concatenate([x_n * inv_w, y_n * inv_w], axis=0)


def face_proj_kernel(coef_ref, bx_ref, by_ref, bw_ref,
                     mx_ref, my_ref, mw_ref, out_ref):
    """only_lm=False: one lane tile of projected screen coords (M pre-folded)."""
    c = coef_ref[...].astype(jnp.bfloat16)
    x_n = mx_ref[...] + jnp.dot(c, bx_ref[...], preferred_element_type=jnp.float32)
    y_n = my_ref[...] + jnp.dot(c, by_ref[...], preferred_element_type=jnp.float32)
    w = mw_ref[...] + jnp.dot(c, bw_ref[...], preferred_element_type=jnp.float32)
    inv_w = 1.0 / w
    out_ref[...] = jnp.concatenate([x_n * inv_w, y_n * inv_w], axis=0)   # (2, tile)


# ------------------------------- wrappers ------------------------------------

def landmarks_projected(coef, basis_lm, mean_lm):
    """(1,Kpad) f32, (Kpad,3*Lpad) bf16, (1,3*Lpad) f32 -> (2, Lpad) f32."""
    l_pad = basis_lm.shape[1] // 3
    return pl.pallas_call(
        landmark_kernel,
        out_shape=jax.ShapeDtypeStruct((2, l_pad), jnp.float32),
        in_specs=[pl.BlockSpec(memory_space=pltpu.MemorySpace.VMEM)] * 3,
        out_specs=pl.BlockSpec(memory_space=pltpu.MemorySpace.VMEM),
    )(coef, basis_lm, mean_lm)


def project_point_cloud(coef, bx, by, bw, mx, my, mw, *, tile):
    """Projected screen coords for all (padded) vertices, as (2, Npad)."""
    k_pad, n_pad = bx.shape
    grid = n_pad // tile
    return pl.pallas_call(
        face_proj_kernel,
        out_shape=jax.ShapeDtypeStruct((2, n_pad), jnp.float32),
        grid_spec=pltpu.PrefetchScalarGridSpec(
            num_scalar_prefetch=0,
            grid=(grid,),
            in_specs=[
                pl.BlockSpec((1, k_pad), lambda i: (0, 0)),      # coef (resident)
                pl.BlockSpec((k_pad, tile), lambda i: (0, i)),   # basis_x (bf16)
                pl.BlockSpec((k_pad, tile), lambda i: (0, i)),   # basis_y (bf16)
                pl.BlockSpec((k_pad, tile), lambda i: (0, i)),   # basis_w (bf16)
                pl.BlockSpec((1, tile), lambda i: (0, i)),       # mean_x
                pl.BlockSpec((1, tile), lambda i: (0, i)),       # mean_y
                pl.BlockSpec((1, tile), lambda i: (0, i)),       # mean_w
            ],
            out_specs=pl.BlockSpec((2, tile), lambda i: (0, i)),
        ),
        compiler_params=pltpu.CompilerParams(
            dimension_semantics=("parallel",),
            vmem_limit_bytes=32 * 1024 * 1024),
    )(coef, bx, by, bw, mx, my, mw)


def _make_coef(alpha, delta, k_pad):
    n_id, n_exp = alpha.shape[0], delta.shape[0]
    coef = jnp.zeros((1, k_pad), jnp.float32)
    coef = coef.at[0, :n_id].set(alpha.astype(jnp.float32))
    coef = coef.at[0, n_id:n_id + n_exp].set(delta.astype(jnp.float32))
    return coef


@partial(jax.jit, static_argnames=("n_lm",))
def _lm_forward(alpha, delta, basis_lm, mean_lm, *, n_lm):
    coef = _make_coef(alpha, delta, basis_lm.shape[0])
    out = landmarks_projected(coef, basis_lm, mean_lm)          # (2, Lpad)
    return out[:, :n_lm].T                                      # (L, 2)


@partial(jax.jit, static_argnames=("n_points", "tile"))
def _full_forward(alpha, delta, bx, by, bw, mx, my, mw, *, n_points, tile):
    coef = _make_coef(alpha, delta, bx.shape[0])
    out = project_point_cloud(coef, bx, by, bw, mx, my, mw, tile=tile)  # (2, Npad)
    return out[:, :n_points].T                                          # (N, 2)


# ------------------------ model matrices (plain JAX glue) --------------------

def viewport_matrix(right, left, top, bottom):
    return jnp.array(
        [[(right - left) / 2.0, 0.0, 0.0, (right + left) / 2.0],
         [0.0, (top - bottom) / 2.0, 0.0, (top + bottom) / 2.0],
         [0.0, 0.0, 0.5, 0.5],
         [0.0, 0.0, 0.0, 1.0]], dtype=jnp.float32)


def perspective_projection_matrix(width, height, near, far, fovy=0.5):
    # TODO(synk): exact FOV convention of the original helper is unknown;
    # a standard OpenGL frustum with fovy=0.5 rad is used deterministically.
    aspect = width / height
    t = math.tan(fovy / 2.0) * near
    b, r = -t, t * aspect
    l = -r
    return jnp.array(
        [[2.0 * near / (r - l), 0.0, (r + l) / (r - l), 0.0],
         [0.0, 2.0 * near / (t - b), (t + b) / (t - b), 0.0],
         [0.0, 0.0, -(far + near) / (far - near), -2.0 * far * near / (far - near)],
         [0.0, 0.0, -1.0, 0.0]], dtype=jnp.float32)


class LandmarksFitModelPallas:
    """Pallas-backed equivalent of Landmarks_Fit_Model.forward()."""

    def __init__(self, image_width, image_height, lm_indices, pca, alpha, delta):
        self.alpha = jnp.asarray(alpha, jnp.float32)          # (30,)
        self.delta = jnp.asarray(delta, jnp.float32)          # (20,)
        self.R = jnp.array([[1.0, 0.0, 0.0],
                            [0.0, -1.0, 0.0],
                            [0.0, 0.0, 1.0]], dtype=jnp.float32)
        self.t = jnp.array([0.0, 0.0, -400.0], dtype=jnp.float32)
        V = viewport_matrix(right=image_width, left=0, top=image_height, bottom=0)
        self.V = V.at[1, 1].set(-V[1, 1])
        self.P = perspective_projection_matrix(image_width, image_height, 300, 2000)

        basis_id = jnp.asarray(pca["basis_id"], jnp.float32)        # (3N, 30)
        basis_exp = jnp.asarray(pca["basis_exp"], jnp.float32)      # (3N, 20)
        std_id = jnp.asarray(pca["std_id"], jnp.float32)
        std_exp = jnp.asarray(pca["std_exp"], jnp.float32)
        mean_full = (jnp.asarray(pca["mean_id"], jnp.float32)
                     + jnp.asarray(pca["mean_exp"], jnp.float32))   # (3N,)

        self.n_id = basis_id.shape[1]
        self.n_exp = basis_exp.shape[1]
        self.k = self.n_id + self.n_exp
        self.k_pad = _round_up(self.k, 16)   # bf16 sublane packing

        # std folded into the (static) bases once; id/exp fused into one K basis.
        basis_cat = jnp.concatenate([basis_id * std_id[None, :],
                                     basis_exp * std_exp[None, :]], axis=1)  # (3N, K)
        n3 = mean_full.shape[0]
        n_pts = n3 // 3
        self.n_pts = n_pts

        # Per-coordinate rows of the (N,3) point cloud.
        Bx = basis_cat[0::3, :]
        By = basis_cat[1::3, :]
        Bz = basis_cat[2::3, :]                                   # (N, K)
        mean3 = mean_full.reshape(n_pts, 3)

        # Fold the static projection M = V @ P @ T into the slabs.  The
        # homogeneous coordinate of G_h is ZERO in the PyTorch source, so only
        # M[:, :3] contributes (the translation column drops out) and
        # w = M[3,:3] . (x, y, z).
        M = self.matrix_transformation()

        def proj(row):                                            # row = M[r, :3]
            b = row[0] * Bx + row[1] * By + row[2] * Bz           # (N, K)
            m = (row[0] * mean3[:, 0] + row[1] * mean3[:, 1]
                 + row[2] * mean3[:, 2])                          # (N,)
            return b, m

        bx, mx = proj(M[0, :3])
        by, my = proj(M[1, :3])
        bw, mw = proj(M[3, :3])

        # --- only_lm=True fast path: static landmark pre-gather ---------------
        lm_idx = jnp.asarray(lm_indices, jnp.int32)
        self.lm_indices = lm_idx
        self.L = int(lm_idx.shape[0])
        self.l_pad = _round_up(max(self.L, 1), 128)

        def lm_basis(b):
            g = jnp.zeros((self.l_pad, self.k_pad), jnp.float32)
            g = g.at[:self.L, :self.k].set(b[lm_idx, :])
            return g.T                                            # (k_pad, l_pad)

        def lm_mean(m, pad_val):
            out = jnp.full((self.l_pad,), pad_val, jnp.float32)
            return out.at[:self.L].set(m[lm_idx])

        self.basis_lm = jnp.concatenate(
            [lm_basis(bx), lm_basis(by), lm_basis(bw)], axis=1).astype(jnp.bfloat16)
        # padded lanes: x/y mean 0, w mean 1  ->  0/1 = 0, no inf ever produced
        self.mean_lm = jnp.concatenate(
            [lm_mean(mx, 0.0), lm_mean(my, 0.0), lm_mean(mw, 1.0)],
            axis=0).reshape(1, 3 * self.l_pad)

        # --- only_lm=False path: lane-dense per-component slabs, bf16 basis ---
        self.tile, self.n_pad, self.grid = _plan_tiles(n_pts)

        def full_basis(b):
            g = jnp.zeros((self.n_pad, self.k_pad), jnp.float32)
            g = g.at[:n_pts, :self.k].set(b)
            return g.T.astype(jnp.bfloat16)                       # (k_pad, n_pad)

        def full_mean(m, pad_val):
            out = jnp.full((1, self.n_pad), pad_val, jnp.float32)
            return out.at[0, :n_pts].set(m)

        self.bx_full = full_basis(bx)
        self.by_full = full_basis(by)
        self.bw_full = full_basis(bw)
        self.mx_full = full_mean(mx, 0.0)
        self.my_full = full_mean(my, 0.0)
        self.mw_full = full_mean(mw, 1.0)

    def matrix_transformation(self):
        T = jnp.eye(4, dtype=jnp.float32)
        T = T.at[:3, :3].set(self.R)
        T = T.at[:3, 3].set(self.t)
        return self.V @ self.P @ T

    def forward(self, only_lm=True):
        if only_lm:
            return _lm_forward(self.alpha, self.delta, self.basis_lm, self.mean_lm,
                               n_lm=self.L)                               # (L, 2)
        return _full_forward(self.alpha, self.delta,
                             self.bx_full, self.by_full, self.bw_full,
                             self.mx_full, self.my_full, self.mw_full,
                             n_points=self.n_pts, tile=self.tile)         # (N, 2)


# --------------------------------- main ---------------------------------------

if __name__ == "__main__":
    key = jax.random.PRNGKey(0)
    N_VERTS = 300                    # deliberately NOT a multiple of 128
    N3 = 3 * N_VERTS
    N_ID, N_EXP, N_LM = 30, 20, 68
    W, H = 64, 64

    k = jax.random.split(key, 8)
    basis_id = jax.random.normal(k[0], (N3, N_ID), jnp.float32) * 0.1
    basis_exp = jax.random.normal(k[1], (N3, N_EXP), jnp.float32) * 0.1
    mean_id = jax.random.uniform(k[2], (N3,), jnp.float32, 10.0, 100.0)
    mean_exp = jax.random.normal(k[3], (N3,), jnp.float32) * 0.5
    std_id = jax.random.uniform(k[4], (N_ID,), jnp.float32, 0.5, 2.0)
    std_exp = jax.random.uniform(k[5], (N_EXP,), jnp.float32, 0.5, 2.0)
    # alpha / delta are zeros in the torch __init__ (trainable params); small
    # non-zero deterministic values are used so the PCA matvec is exercised.
    alpha = jax.random.normal(k[6], (N_ID,), jnp.float32) * 0.1
    delta = jax.random.normal(k[7], (N_EXP,), jnp.float32) * 0.1
    lm_indices = (jnp.arange(N_LM, dtype=jnp.int32) * 4) % N_VERTS

    pca = dict(basis_id=basis_id, basis_exp=basis_exp,
               mean_id=mean_id, mean_exp=mean_exp,
               std_id=std_id, std_exp=std_exp)

    model = LandmarksFitModelPallas(W, H, lm_indices, pca, alpha, delta)

    lm = jax.block_until_ready(model.forward(only_lm=True))      # (68, 2)
    full = jax.block_until_ready(model.forward(only_lm=False))   # (300, 2)

    # pure-JAX reference (HIGHEST precision so it is a near-exact f32 oracle).
    Px = jax.lax.Precision.HIGHEST
    G_full = (mean_id + mean_exp
              + jnp.matmul(basis_id, alpha * std_id, precision=Px)
              + jnp.matmul(basis_exp, delta * std_exp, precision=Px))
    M_ref = model.matrix_transformation()

    def project_ref(G):
        G_h = jnp.concatenate([G, jnp.zeros((G.shape[0], 1), jnp.float32)], axis=1)
        proj = jnp.matmul(M_ref, G_h.T, precision=Px)
        proj = proj / proj[3:4, :]
        return proj[:2, :].T

    ref_lm = project_ref(G_full.reshape(-1, 3)[lm_indices])
    ref_full = project_ref(G_full.reshape(-1, 3))

    assert lm.shape == (N_LM, 2)
    assert full.shape == (N_VERTS, 2)
    # tolerance sized for the bf16 basis slabs + MXU bf16 accumulation passes
    # vs. the HIGHEST-precision f32 reference.
    assert jnp.allclose(lm, ref_lm, atol=1e-1, rtol=1e-2)
    assert jnp.allclose(full, ref_full, atol=1e-1, rtol=1e-2)
    print("KERNEL_OK")
</pallas_src>

<mosaic_0001>
module attributes {stable_mosaic.version = 11 : i64} {
  func.func @landmark_kernel(%arg0: memref<1x64xf32, #tpu.memory_space<vmem>>, %arg1: memref<64x384xbf16, #tpu.memory_space<vmem>>, %arg2: memref<1x384xf32, #tpu.memory_space<vmem>>, %arg3: memref<2x128xf32, #tpu.memory_space<vmem>>) attributes {dimension_semantics = [], scalar_prefetch = 0 : i64, scratch_operands = 0 : i64, tpu.core_type = #tpu.core_type<tc>} {
    %c0 = arith.constant 0 : index
    %c0_0 = arith.constant 0 : index
    %0 = vector.load %arg2[%c0, %c0_0] : memref<1x384xf32, #tpu.memory_space<vmem>>, vector<1x384xf32>
    %c0_1 = arith.constant 0 : index
    %c0_2 = arith.constant 0 : index
    %1 = vector.load %arg0[%c0_1, %c0_2] : memref<1x64xf32, #tpu.memory_space<vmem>>, vector<1x64xf32>
    %2 = arith.truncf %1 : vector<1x64xf32> to vector<1x64xbf16>
    %c0_3 = arith.constant 0 : index
    %c0_4 = arith.constant 0 : index
    %3 = vector.load %arg1[%c0_3, %c0_4] : memref<64x384xbf16, #tpu.memory_space<vmem>>, vector<64x384xbf16>
    %cst = arith.constant dense<0.000000e+00> : vector<1x384xf32>
    %4 = tpu.matmul %2, %3, %cst {dimension_numbers = #tpu.dot_dimension_numbers<[1], [0], [0], [1], [0, 0, 1, 1], [], []>} : vector<1x64xbf16>, vector<64x384xbf16>, vector<1x384xf32> -> vector<1x384xf32>
    %5 = arith.addf %0, %4 : vector<1x384xf32>
    %6 = vector.extract_strided_slice %5 {offsets = [0, 0], sizes = [1, 128], strides = [1, 1]} : vector<1x384xf32> to vector<1x128xf32>
    %7 = vector.extract_strided_slice %5 {offsets = [0, 128], sizes = [1, 128], strides = [1, 1]} : vector<1x384xf32> to vector<1x128xf32>
    %8 = vector.extract_strided_slice %5 {offsets = [0, 256], sizes = [1, 128], strides = [1, 1]} : vector<1x384xf32> to vector<1x128xf32>
    %cst_5 = arith.constant 1.000000e+00 : f32
    %9 = vector.broadcast %cst_5 : f32 to vector<1x128xf32>
    %10 = arith.divf %9, %8 : vector<1x128xf32>
    %11 = arith.mulf %6, %10 : vector<1x128xf32>
    %12 = arith.mulf %7, %10 : vector<1x128xf32>
    %13 = tpu.concatenate %11, %12 in 0 : vector<1x128xf32>, vector<1x128xf32> -> vector<2x128xf32>
    %c0_6 = arith.constant 0 : index
    %c0_7 = arith.constant 0 : index
    %14 = vector.load %arg3[%c0_6, %c0_7] : memref<2x128xf32, #tpu.memory_space<vmem>>, vector<2x128xf32>
    tpu.vector_store %arg3[%c0_6, %c0_7], %13 {strides = array<i32>} : memref<2x128xf32, #tpu.memory_space<vmem>>, vector<2x128xf32>,
    return
  }
}

</mosaic_0001>

<llo_original>
// kernel: _lm_forward.1
$region0: #{_lm_forward.1}
  #allocation0 [shape = 'u32[]', space=smem, size = 0x4, offset = 0x4, fixed_abs, tag = 'smem constant byte address 0x4 - core index']
  #allocation1 [shape = 'u32[144,128]{1,0:T(1,128)}', space=vmem, size = 0x12000, scoped, tag = 'internal scratch']
  %s0 = inlined_call_operand.vmem [shape: f32[1,64], index: 0, kind: input, shape index: {}]
  %s1 = inlined_call_operand.hbm [shape: bf16[64,384], index: 1, kind: input, shape index: {}]
  %s2 = inlined_call_operand.vmem [shape: f32[1,384], index: 2, kind: input, shape index: {}]
  %s3 = inlined_call_operand.vmem [shape: f32[2,128], index: 3, kind: output, shape index: {}]
  %s4 = sld [smem:[#allocation0]]
  $region26: #{_lm_forward.1} parent=0
    _
  %s6 = ssub.s32 1, %s4
  %s7 = scalar_select 0, %s6, %s4
  $region1: #{_lm_forward.1} parent=0
    #allocation2 [shape = 'u8[49152]{0}', space=vmem, size = 0xc000, scoped, tag = 'input window, operand 1, single buffered']
    #allocation3 [shape = 's32[1]{0}', space=sflag, size = 0x4, scoped, tag = 'scoped memory for _lm_forward.1']
    %8 = vsyncpa [#allocation3], 0
    // Predicated region
    $region2: #{_lm_forward.1} parent=1 // pred_check
      _
    $region3: #{_lm_forward.1} parent=1 // pred_check_branch
      %10 = sbr.rel (0) target = $region5
    $region4: #{_lm_forward.1} parent=1 // pred_region
      _
    $region5: #{_lm_forward.1} parent=1 // pred_fallthru
      _
    // Predicated region
    $region6: #{_lm_forward.1} parent=1 // pred_check
      _
    $region7: #{_lm_forward.1} parent=1 // pred_check_branch
      %12 = sbr.rel (0) target = $region9
    $region8: #{_lm_forward.1} parent=1 // pred_region
      %s14 = ssub.s32 1536, 1536
      %15 = vsyncadd [#allocation3], %s14
      %s16 = sshll.u32 [#allocation2], 4
      %s17 = int_to_ptr.vmem [resolvable:$true] %s16
      %22 = dma.hbm_to_vmem [thread:$0]  %s1, 1536, %s17, [#allocation3], 192, 192, 12
    $region9: #{_lm_forward.1} parent=1 // pred_fallthru
      _
    // Predicated region
    $region10: #{_lm_forward.1} parent=1 // pred_check
      _
    $region11: #{_lm_forward.1} parent=1 // pred_check_branch
      %24 = sbr.rel (0) target = $region13
    $region12: #{_lm_forward.1} parent=1 // pred_region
      _
    $region13: #{_lm_forward.1} parent=1 // pred_fallthru
      _
    // Predicated region
    $region14: #{_lm_forward.1} parent=1 // pred_check
      _
    $region15: #{_lm_forward.1} parent=1 // pred_check_branch
      %26 = sbr.rel (0) target = $region17
    $region16: #{_lm_forward.1} parent=1 // pred_region
      %27 = dma.done [#allocation3], 1536
    $region17: #{_lm_forward.1} parent=1 // pred_fallthru
      _
    %v29 = vld [vmem:[%s2] sm:$0x7]
    %v30 = vld [vmem:[%s0] sm:$0x1]
    %v31 = vpack.c.bf16 %v30, %v30
    %v32 = vld [vmem:[#allocation2] sm:$0xff]
    %v33 = vld [vmem:[#allocation2 + $0x8] sm:$0xf]
    %v34 = vld [vmem:[#allocation2 + $0xc] sm:$0xff]
    %v35 = vld [vmem:[#allocation2 + $0x14] sm:$0xf]
    %v36 = vld [vmem:[#allocation2 + $0x18] sm:$0xff]
    %v37 = vld [vmem:[#allocation2 + $0x20] sm:$0xf]
    %v38 = vld [vmem:[#allocation2 + $0x24] sm:$0xff]
    %v39 = vld [vmem:[#allocation2 + $0x2c] sm:$0xf]
    %v40 = vld [vmem:[#allocation2 + $0x30] sm:$0xff]
    %v41 = vld [vmem:[#allocation2 + $0x38] sm:$0xf]
    %v42 = vld [vmem:[#allocation2 + $0x3c] sm:$0xff]
    %v43 = vld [vmem:[#allocation2 + $0x44] sm:$0xf]
    %v44 = vld [vmem:[#allocation2 + $0x48] sm:$0xff]
    %v45 = vld [vmem:[#allocation2 + $0x50] sm:$0xf]
    %v46 = vld [vmem:[#allocation2 + $0x54] sm:$0xff]
    %v47 = vld [vmem:[#allocation2 + $0x5c] sm:$0xf]
    %v64 = vunpack.c.l.b16 %v32
    %v65 = vunpack.c.h.b16 %v32
    %v66 = vunpack.c.l.b16 %v33
    %v67 = vunpack.c.l.b16 %v34
    %v68 = vunpack.c.h.b16 %v34
    %v69 = vunpack.c.l.b16 %v35
    %v70 = vunpack.c.l.b16 %v36
    %v71 = vunpack.c.h.b16 %v36
    %v72 = vunpack.c.l.b16 %v37
    %v73 = vunpack.c.l.b16 %v38
    %v74 = vunpack.c.h.b16 %v38
    %v75 = vunpack.c.l.b16 %v39
    %v76 = vunpack.c.l.b16 %v40
    %v77 = vunpack.c.h.b16 %v40
    %v78 = vunpack.c.l.b16 %v41
    %v79 = vunpack.c.l.b16 %v42
    %v80 = vunpack.c.h.b16 %v42
    %v81 = vunpack.c.l.b16 %v43
    %v82 = vunpack.c.l.b16 %v44
    %v83 = vunpack.c.h.b16 %v44
    %v84 = vunpack.c.l.b16 %v45
    %v85 = vunpack.c.l.b16 %v46
    %v86 = vunpack.c.h.b16 %v46
    %v87 = vunpack.c.l.b16 %v47
    %v88 = vpack.c.b16 %v67, %v64
    %v89 = vpack.c.b16 %v68, %v65
    %v90 = vpack.c.b16 %v69, %v66
    %v91 = vpack.c.b16 %v73, %v70
    %v92 = vpack.c.b16 %v74, %v71
    %v93 = vpack.c.b16 %v75, %v72
    %v94 = vpack.c.b16 %v79, %v76
    %v95 = vpack.c.b16 %v80, %v77
    %v96 = vpack.c.b16 %v81, %v78
    %v97 = vpack.c.b16 %v85, %v82
    %v98 = vpack.c.b16 %v86, %v83
    %v99 = vpack.c.b16 %v87, %v84
    %vm112 = vcmask 523264
    %v114 = vsel %vm112, %v31, 0
    %116 = vmatprep.subr.bf16.mxu0 %v89
    %117 = vmatpush1.bf16.msra.mxu0 %v88
    %118 = vmatprep.subr.bf16.mxu0 %v92
    %119 = vmatpush1.bf16.msra.mxu0 %v91
    %120 = vmatprep.subr.bf16.mxu0 %v95
    %121 = vmatpush1.bf16.msra.mxu0 %v94
    %122 = vmatprep.subr.bf16.mxu0 %v98
    %123 = vmatpush1.bf16.msra.mxu0 %v97
    %124 = vmatprep.subr.bf16.mxu0 0
    %125 = vmatpush1.bf16.msra.mxu0 0
    %126 = vmatprep.subr.bf16.mxu0 0
    %127 = vmatpush1.bf16.msra.mxu0 0
    %128 = vmatprep.subr.bf16.mxu0 0
    %129 = vmatpush1.bf16.msra.mxu0 0
    %130 = vmatprep.subr.bf16.mxu0 0
    %131 = vmatpush1.bf16.msra.mxu0 0
    %132 = vmatprep.subr.bf16.mxu0 0
    %133 = vmatpush1.bf16.msra.mxu0 0
    %134 = vmatprep.subr.bf16.mxu0 0
    %135 = vmatpush1.bf16.msra.mxu0 0
    %136 = vmatprep.subr.bf16.mxu0 0
    %137 = vmatpush1.bf16.msra.mxu0 0
    %138 = vmatprep.subr.bf16.mxu0 0
    %139 = vmatpush1.bf16.msra.mxu0 0
    %140 = vmatprep.subr.bf16.mxu0 0
    %141 = vmatpush1.bf16.msra.mxu0 0
    %142 = vmatprep.subr.bf16.mxu0 0
    %143 = vmatpush1.bf16.msra.mxu0 0
    %144 = vmatprep.subr.bf16.mxu0 0
    %145 = vmatpush1.bf16.msra.mxu0 0
    %146 = vmatprep.subr.bf16.mxu0 0
    %147 = vmatpush1.bf16.msra.mxu0 0
    %148 = vmatprep.mubr.bf16.mxu0 0
    %149 = vmatmul.mubr.bf16.gmra.mrb[0].mxu0 %v114
    %v150 = vpop.f32.mrb[0].mxu0
    %v151 = vadd.f32 0.0, %v150
    %v152 = vpop.f32.mrb[0].mxu0
    %v153 = vadd.f32 0.0, %v152
    %v154 = vpop.f32.mrb[0].mxu0
    %v155 = vpop.f32.mrb[0].mxu0
    %156 = vdwg.mxu0
    %157 = vmatprep.subr.bf16.mxu0 0
    %158 = vmatpush1.bf16.msra.mxu0 %v90
    %159 = vmatprep.subr.bf16.mxu0 0
    %160 = vmatpush1.bf16.msra.mxu0 %v93
    %161 = vmatprep.subr.bf16.mxu0 0
    %162 = vmatpush1.bf16.msra.mxu0 %v96
    %163 = vmatprep.subr.bf16.mxu0 0
    %164 = vmatpush1.bf16.msra.mxu0 %v99
    %165 = vmatprep.subr.bf16.mxu0 0
    %166 = vmatpush1.bf16.msra.mxu0 0
    %167 = vmatprep.subr.bf16.mxu0 0
    %168 = vmatpush1.bf16.msra.mxu0 0
    %169 = vmatprep.subr.bf16.mxu0 0
    %170 = vmatpush1.bf16.msra.mxu0 0
    %171 = vmatprep.subr.bf16.mxu0 0
    %172 = vmatpush1.bf16.msra.mxu0 0
    %173 = vmatprep.subr.bf16.mxu0 0
    %174 = vmatpush1.bf16.msra.mxu0 0
    %175 = vmatprep.subr.bf16.mxu0 0
    %176 = vmatpush1.bf16.msra.mxu0 0
    %177 = vmatprep.subr.bf16.mxu0 0
    %178 = vmatpush1.bf16.msra.mxu0 0
    %179 = vmatprep.subr.bf16.mxu0 0
    %180 = vmatpush1.bf16.msra.mxu0 0
    %181 = vmatprep.subr.bf16.mxu0 0
    %182 = vmatpush1.bf16.msra.mxu0 0
    %183 = vmatprep.subr.bf16.mxu0 0
    %184 = vmatpush1.bf16.msra.mxu0 0
    %185 = vmatprep.subr.bf16.mxu0 0
    %186 = vmatpush1.bf16.msra.mxu0 0
    %187 = vmatprep.subr.bf16.mxu0 0
    %188 = vmatpush1.bf16.msra.mxu0 0
    %189 = vmatprep.mubr.bf16.mxu0 0
    %190 = vmatmul.mubr.bf16.gmra.mrb[0].mxu0 %v114
    %v191 = vpop.f32.mrb[0].mxu0
    %v192 = vadd.f32 0.0, %v191
    %v193 = vpop.f32.mrb[0].mxu0
    %v194 = vpop.f32.mrb[0].mxu0
    %v195 = vpop.f32.mrb[0].mxu0
    %196 = vdwg.mxu0
    %v200 = vcombine.low %v151, %v153
    %v202 = vunpack.c.l.s4 1966171168
    %v203 = vunpack.c.0.s8 %v202
    %v204 = vlaneseq
    %v205 = vshrl.u32 %v204, 7
    %v206 = vsub.s32 %v203, %v205
    %v207 = vrot.slane %v200, %v206
    %v209 = vunpack.c.l.s4 1966171168
    %v210 = vunpack.c.0.s8 %v209
    %v211 = vlaneseq
    %v212 = vshrl.u32 %v211, 7
    %v213 = vsub.s32 %v210, %v212
    %v214 = vrot.slane %v192, %v213
    %v215 = vcombine.low %v207, %v214
    %v217 = vunpack.c.l.s4 1966171168
    %v218 = vunpack.c.0.s8 %v217
    %v219 = vlaneseq
    %v220 = vshrl.u32 %v219, 7
    %v221 = vsub.s32 %v218, %v220
    %v222 = vrot.slane %v215, %v221
    %v224 = vadd.f32 %v29, %v222
    %v226 = vrot.slane %v224, 2
    %v228 = vrcp.pop %v226
    %v229 = vmul.f32 1.0, %v228
    %v230 = vmul.f32 %v224, %v229
    %v231 = vrot.slane %v224, 1
    %v233 = vmul.f32 %v231, %v229
    %v235 = vlaneseq
    %v236 = vshrl.u32 %v235, 7
    %v237 = vsub.s32 0, %v236
    %v238 = vrot.slane %v233, %v237
    %vm240 = vcmask 1040384
    %v241 = vsel %vm240, %v230, %v238
    %242 = vst [vmem:[%s3] sm:$0x3] %v241
    // Predicated region
    $region18: #{_lm_forward.1} parent=1 // pred_check
      _
    $region19: #{_lm_forward.1} parent=1 // pred_check_branch
      %244 = sbr.rel (0) target = $region21
    $region20: #{_lm_forward.1} parent=1 // pred_region
      _
    $region21: #{_lm_forward.1} parent=1 // pred_fallthru
      _
    // Predicated region
    $region22: #{_lm_forward.1} parent=1 // pred_check
      _
    $region23: #{_lm_forward.1} parent=1 // pred_check_branch
      %246 = sbr.rel (0) target = $region25
    $region24: #{_lm_forward.1} parent=1 // pred_region
      _
    $region25: #{_lm_forward.1} parent=1 // pred_fallthru
      _
    %247 = vsyncpa [#allocation3], 1

</llo_original>
